<compile_context>
chip_gen: v7x
topology: tpu7x:2x2x1
jax: 0.10.0
libtpu: 0.0.40
codegen_flags: <defaults>
</compile_context>

<pallas_src>
import functools

import jax
import jax.numpy as jnp
from jax.experimental import pallas as pl
from jax.experimental.pallas import tpu as pltpu


def _round_up(x, m):
    return (x + m - 1) // m * m


def decoder_kernel(x_ref, w1_ref, b1_ref, w2_ref, b2_ref, mu_ref):
    # Hidden layer: relu(x @ W1 + b1).  bf16 MXU operands, f32 accumulation.
    x_bf = x_ref[...].astype(jnp.bfloat16)
    h = jnp.dot(x_bf, w1_ref[...], preferred_element_type=jnp.float32)
    h = jnp.maximum(h + b1_ref[...], 0.0)            # f32 epilogue, b1 is [1, H_p]

    # Output layer: tanh(h @ W2 + b2).  tanh -> EUP (separate issue slot).
    y = jnp.dot(h.astype(jnp.bfloat16), w2_ref[...],
                preferred_element_type=jnp.float32)
    mu_ref[...] = jnp.tanh(y + b2_ref[...]).astype(mu_ref.dtype)


@functools.partial(jax.jit, static_argnames=("tb",))
def decoder_forward(x, w1, b1, w2, b2, *, tb=256):
    """Returns (mu, scale) parameterizing Normal(mu, scale); scale is all ones."""
    B, D_in = x.shape
    H = w1.shape[1]
    D_out = w2.shape[1]
    out_dtype = x.dtype

    # --- lane/MXU-aligned feature dims (zeros are free flops) ----------------
    d_in_p = _round_up(D_in, 128)
    h_p = _round_up(H, 128)
    d_out_p = _round_up(D_out, 128)

    # --- load-balanced batch tiling: minimal padding for ragged batches ------
    num_blocks = pl.cdiv(B, tb)
    tb_eff = _round_up(pl.cdiv(B, num_blocks), 8)     # rows per tile, mult of 8
    b_p = num_blocks * tb_eff

    # Wrapper-side pads are elided when shapes are already aligned.
    if (b_p, d_in_p) != (B, D_in):
        x_p = jnp.pad(x, ((0, b_p - B), (0, d_in_p - D_in)))
    else:
        x_p = x
    w1_p = jnp.pad(w1, ((0, d_in_p - D_in), (0, h_p - H))).astype(jnp.bfloat16)
    w2_p = jnp.pad(w2, ((0, h_p - H), (0, d_out_p - D_out))).astype(jnp.bfloat16)
    b1_p = jnp.pad(b1.reshape(1, -1).astype(jnp.float32), ((0, 0), (0, h_p - H)))
    b2_p = jnp.pad(b2.reshape(1, -1).astype(jnp.float32), ((0, 0), (0, d_out_p - D_out)))

    # --- VMEM budget: resident weights + double-buffered IO tiles + slack ----
    weight_bytes = (d_in_p * h_p + h_p * d_out_p) * 2 + (h_p + d_out_p) * 4
    io_bytes = 2 * tb_eff * d_in_p * 4 + 2 * tb_eff * d_out_p * 4
    interm_bytes = tb_eff * h_p * 4 + tb_eff * d_out_p * 4
    vmem_limit = min(48 << 20, 2 * (weight_bytes + io_bytes + interm_bytes) + (4 << 20))
    vmem_limit = max(vmem_limit, 16 << 20)

    cost = pl.CostEstimate(
        flops=2 * b_p * (d_in_p * h_p + h_p * d_out_p),
        transcendentals=b_p * d_out_p,
        bytes_accessed=(b_p * d_in_p * 4 + b_p * d_out_p * 4
                        + (d_in_p * h_p + h_p * d_out_p) * 2
                        + (h_p + d_out_p) * 4),
    )

    mu_p = pl.pallas_call(
        decoder_kernel,
        out_shape=jax.ShapeDtypeStruct((b_p, d_out_p), out_dtype),
        grid_spec=pltpu.PrefetchScalarGridSpec(
            num_scalar_prefetch=0,
            grid=(num_blocks,),
            in_specs=[
                pl.BlockSpec((tb_eff, d_in_p), lambda i: (i, 0)),   # x tile streams
                pl.BlockSpec((d_in_p, h_p), lambda i: (0, 0)),      # weights resident
                pl.BlockSpec((1, h_p), lambda i: (0, 0)),
                pl.BlockSpec((h_p, d_out_p), lambda i: (0, 0)),
                pl.BlockSpec((1, d_out_p), lambda i: (0, 0)),
            ],
            out_specs=pl.BlockSpec((tb_eff, d_out_p), lambda i: (i, 0)),
        ),
        compiler_params=pltpu.CompilerParams(
            dimension_semantics=("parallel",),      # batch tiles are independent
            vmem_limit_bytes=int(vmem_limit),
        ),
        cost_estimate=cost,
    )(x_p, w1_p, b1_p, w2_p, b2_p)

    mu = mu_p[:B, :D_out] if (b_p, d_out_p) != (B, D_out) else mu_p
    # Normal(mu, ones_like(mu)): constant unit scale comes from the wrapper,
    # not from the kernel (saves half the kernel's HBM writeback).
    # TODO(synk): torch.distributions.Normal has no Pallas equivalent; we return
    # its (loc, scale) parameterization instead.
    scale = jnp.ones_like(mu)
    return mu, scale


def init_decoder_params(key, D_in, H, D_out, dtype=jnp.float32):
    """Deterministic init mimicking torch.nn.Linear's U(-1/sqrt(fan_in), ...)."""
    k1, k2, k3, k4 = jax.random.split(key, 4)
    bound1 = 1.0 / (D_in ** 0.5)
    bound2 = 1.0 / (H ** 0.5)
    # Stored transposed relative to PyTorch: [in, out]
    w1 = jax.random.uniform(k1, (D_in, H), dtype, minval=-bound1, maxval=bound1)
    b1 = jax.random.uniform(k2, (1, H), dtype, minval=-bound1, maxval=bound1)
    w2 = jax.random.uniform(k3, (H, D_out), dtype, minval=-bound2, maxval=bound2)
    b2 = jax.random.uniform(k4, (1, D_out), dtype, minval=-bound2, maxval=bound2)
    return w1, b1, w2, b2


if __name__ == "__main__":
    # Small shapes consistent with the module: x [B, D_in]
    B, D_in, H, D_out = 8, 32, 64, 16

    key = jax.random.PRNGKey(0)
    kx, kp = jax.random.split(key)
    x = jax.random.normal(kx, (B, D_in), jnp.float32)
    w1, b1, w2, b2 = init_decoder_params(kp, D_in, H, D_out)

    mu, scale = decoder_forward(x, w1, b1, w2, b2)
    mu, scale = jax.block_until_ready((mu, scale))

    # Pure-JAX f32 reference (kernel uses bf16 MXU inputs with f32 accumulation,
    # so use a looser tolerance than pure-f32).
    h_ref = jnp.maximum(x @ w1 + b1, 0.0)
    mu_ref = jnp.tanh(h_ref @ w2 + b2)
    assert mu.shape == (B, D_out) and scale.shape == (B, D_out)
    assert jnp.allclose(mu, mu_ref, atol=2e-2, rtol=2e-2), "mu mismatch vs reference"
    assert jnp.all(scale == 1.0), "scale must be all ones"

    print("KERNEL_OK")
</pallas_src>

<mosaic_0001>
module attributes {stable_mosaic.version = 11 : i64} {
  func.func @decoder_kernel(%arg0: i32, %arg1: memref<8x128xf32, #tpu.memory_space<vmem>>, %arg2: memref<128x128xbf16, #tpu.memory_space<vmem>>, %arg3: memref<1x128xf32, #tpu.memory_space<vmem>>, %arg4: memref<128x128xbf16, #tpu.memory_space<vmem>>, %arg5: memref<1x128xf32, #tpu.memory_space<vmem>>, %arg6: memref<8x128xf32, #tpu.memory_space<vmem>>) attributes {dimension_semantics = [#tpu.dimension_semantics<parallel>], iteration_bounds = array<i64: 1>, scalar_prefetch = 0 : i64, scratch_operands = 0 : i64, tpu.core_type = #tpu.core_type<tc>, window_params = [{transform_indices = @transform_0, window_bounds = array<i64: 8, 128>}, {pipeline_mode = #tpu.pipeline_mode<synchronous>, transform_indices = @transform_1, window_bounds = array<i64: 128, 128>}, {pipeline_mode = #tpu.pipeline_mode<synchronous>, transform_indices = @transform_2, window_bounds = array<i64: 1, 128>}, {pipeline_mode = #tpu.pipeline_mode<synchronous>, transform_indices = @transform_3, window_bounds = array<i64: 128, 128>}, {pipeline_mode = #tpu.pipeline_mode<synchronous>, transform_indices = @transform_4, window_bounds = array<i64: 1, 128>}, {transform_indices = @transform_5, window_bounds = array<i64: 8, 128>}]} {
    %c0 = arith.constant 0 : index
    %c0_0 = arith.constant 0 : index
    %0 = vector.load %arg1[%c0, %c0_0] : memref<8x128xf32, #tpu.memory_space<vmem>>, vector<8x128xf32>
    %1 = arith.truncf %0 : vector<8x128xf32> to vector<8x128xbf16>
    %c0_1 = arith.constant 0 : index
    %c0_2 = arith.constant 0 : index
    %2 = vector.load %arg2[%c0_1, %c0_2] : memref<128x128xbf16, #tpu.memory_space<vmem>>, vector<128x128xbf16>
    %cst = arith.constant dense<0.000000e+00> : vector<8x128xf32>
    %3 = tpu.matmul %1, %2, %cst {dimension_numbers = #tpu.dot_dimension_numbers<[1], [0], [0], [1], [0, 0, 1, 1], [], []>} : vector<8x128xbf16>, vector<128x128xbf16>, vector<8x128xf32> -> vector<8x128xf32>
    %c0_3 = arith.constant 0 : index
    %c0_4 = arith.constant 0 : index
    %4 = vector.load %arg3[%c0_3, %c0_4] : memref<1x128xf32, #tpu.memory_space<vmem>>, vector<1x128xf32>
    %5 = vector.broadcast %4 : vector<1x128xf32> to vector<8x128xf32>
    %6 = arith.addf %3, %5 : vector<8x128xf32>
    %cst_5 = arith.constant 0.000000e+00 : f32
    %7 = vector.broadcast %cst_5 : f32 to vector<8x128xf32>
    %8 = arith.maximumf %6, %7 : vector<8x128xf32>
    %9 = arith.truncf %8 : vector<8x128xf32> to vector<8x128xbf16>
    %c0_6 = arith.constant 0 : index
    %c0_7 = arith.constant 0 : index
    %10 = vector.load %arg4[%c0_6, %c0_7] : memref<128x128xbf16, #tpu.memory_space<vmem>>, vector<128x128xbf16>
    %cst_8 = arith.constant dense<0.000000e+00> : vector<8x128xf32>
    %11 = tpu.matmul %9, %10, %cst_8 {dimension_numbers = #tpu.dot_dimension_numbers<[1], [0], [0], [1], [0, 0, 1, 1], [], []>} : vector<8x128xbf16>, vector<128x128xbf16>, vector<8x128xf32> -> vector<8x128xf32>
    %c0_9 = arith.constant 0 : index
    %c0_10 = arith.constant 0 : index
    %12 = vector.load %arg5[%c0_9, %c0_10] : memref<1x128xf32, #tpu.memory_space<vmem>>, vector<1x128xf32>
    %13 = vector.broadcast %12 : vector<1x128xf32> to vector<8x128xf32>
    %14 = arith.addf %11, %13 : vector<8x128xf32>
    %15 = math.tanh %14 : vector<8x128xf32>
    %c0_11 = arith.constant 0 : index
    %c0_12 = arith.constant 0 : index
    %16 = vector.load %arg6[%c0_11, %c0_12] : memref<8x128xf32, #tpu.memory_space<vmem>>, vector<8x128xf32>
    tpu.vector_store %arg6[%c0_11, %c0_12], %15 {strides = array<i32>} : memref<8x128xf32, #tpu.memory_space<vmem>>, vector<8x128xf32>,
    return
  }
  func.func @transform_0(%arg0: i32) -> (i32, i32) {
    %c0_i32 = arith.constant 0 : i32
    %c0_i32_0 = arith.constant 0 : i32
    return %arg0, %c0_i32 : i32, i32
  }
  func.func @transform_1(%arg0: i32) -> (i32, i32) {
    %c0_i32 = arith.constant 0 : i32
    %c0_i32_0 = arith.constant 0 : i32
    %c0_i32_1 = arith.constant 0 : i32
    return %c0_i32, %c0_i32_0 : i32, i32
  }
  func.func @transform_2(%arg0: i32) -> (i32, i32) {
    %c0_i32 = arith.constant 0 : i32
    %c0_i32_0 = arith.constant 0 : i32
    %c0_i32_1 = arith.constant 0 : i32
    return %c0_i32, %c0_i32_0 : i32, i32
  }
  func.func @transform_3(%arg0: i32) -> (i32, i32) {
    %c0_i32 = arith.constant 0 : i32
    %c0_i32_0 = arith.constant 0 : i32
    %c0_i32_1 = arith.constant 0 : i32
    return %c0_i32, %c0_i32_0 : i32, i32
  }
  func.func @transform_4(%arg0: i32) -> (i32, i32) {
    %c0_i32 = arith.constant 0 : i32
    %c0_i32_0 = arith.constant 0 : i32
    %c0_i32_1 = arith.constant 0 : i32
    return %c0_i32, %c0_i32_0 : i32, i32
  }
  func.func @transform_5(%arg0: i32) -> (i32, i32) {
    %c0_i32 = arith.constant 0 : i32
    %c0_i32_0 = arith.constant 0 : i32
    return %arg0, %c0_i32 : i32, i32
  }
}

</mosaic_0001>

<llo_original>
// kernel: decoder_forward.1
$region0: #{decoder_forward.1}
  #allocation0 [shape = 'u32[]', space=smem, size = 0x4, offset = 0x4, fixed_abs, tag = 'smem constant byte address 0x4 - core index']
  #allocation1 [shape = 'u32[144,128]{1,0:T(1,128)}', space=vmem, size = 0x12000, scoped, tag = 'internal scratch']
  %s0 = inlined_call_operand.vmem [shape: f32[8,128], index: 0, kind: input, shape index: {}]
  %s1 = inlined_call_operand.vmem [shape: bf16[128,128], index: 1, kind: input, shape index: {}]
  %s2 = inlined_call_operand.vmem [shape: f32[1,128], index: 2, kind: input, shape index: {}]
  %s3 = inlined_call_operand.vmem [shape: bf16[128,128], index: 3, kind: input, shape index: {}]
  %s4 = inlined_call_operand.vmem [shape: f32[1,128], index: 4, kind: input, shape index: {}]
  %s5 = inlined_call_operand.hbm [shape: f32[8,128], index: 5, kind: output, shape index: {}]
  %s6 = sld [smem:[#allocation0]]
  $region30: #{decoder_forward.1} parent=0
    _
  %s8 = ssub.s32 1, %s6
  %s9 = scalar_select 0, %s8, %s6
  $region1: #{decoder_forward.1} parent=0
    #allocation2 [shape = 'u8[4096]{0}', space=vmem, size = 0x1000, scoped, tag = 'output window, operand 0, single buffered']
    #allocation3 [shape = 's32[1]{0}', space=sflag, size = 0x4, scoped, tag = 'scoped memory for decoder_forward.1']
    %10 = vsyncpa [#allocation3], 0
    // Predicated region
    $region2: #{decoder_forward.1} parent=1 // pred_check
      _
    $region3: #{decoder_forward.1} parent=1 // pred_check_branch
      %12 = sbr.rel (0) target = $region5
    $region4: #{decoder_forward.1} parent=1 // pred_region
      _
    $region5: #{decoder_forward.1} parent=1 // pred_fallthru
      _
    // Predicated region
    $region6: #{decoder_forward.1} parent=1 // pred_check
      _
    $region7: #{decoder_forward.1} parent=1 // pred_check_branch
      %14 = sbr.rel (0) target = $region9
    $region8: #{decoder_forward.1} parent=1 // pred_region
      _
    $region9: #{decoder_forward.1} parent=1 // pred_fallthru
      _
    // Predicated region
    $region10: #{decoder_forward.1} parent=1 // pred_check
      _
    $region11: #{decoder_forward.1} parent=1 // pred_check_branch
      %16 = sbr.rel (0) target = $region13
    $region12: #{decoder_forward.1} parent=1 // pred_region
      _
    $region13: #{decoder_forward.1} parent=1 // pred_fallthru
      _
    // Predicated region
    $region14: #{decoder_forward.1} parent=1 // pred_check
      _
    $region15: #{decoder_forward.1} parent=1 // pred_check_branch
      %18 = sbr.rel (0) target = $region17
    $region16: #{decoder_forward.1} parent=1 // pred_region
      _
    $region17: #{decoder_forward.1} parent=1 // pred_fallthru
      _
    // Predicated region
    $region18: #{decoder_forward.1} parent=1 // pred_check
      _
    $region19: #{decoder_forward.1} parent=1 // pred_check_branch
      %20 = sbr.rel (0) target = $region21
    $region20: #{decoder_forward.1} parent=1 // pred_region
      _
    $region21: #{decoder_forward.1} parent=1 // pred_fallthru
      _
    %v22 = vld [vmem:[%s0] sm:$0xff]
    %v23 = vpack.c.bf16 %v22, %v22
    %v24 = vld [vmem:[%s1] sm:$0xf]
    %v25 = vld [vmem:[%s1 + $0x4] sm:$0xf]
    %v26 = vld [vmem:[%s1 + $0x8] sm:$0xf]
    %v27 = vld [vmem:[%s1 + $0xc] sm:$0xf]
    %v28 = vld [vmem:[%s1 + $0x10] sm:$0xf]
    %v29 = vld [vmem:[%s1 + $0x14] sm:$0xf]
    %v30 = vld [vmem:[%s1 + $0x18] sm:$0xf]
    %v31 = vld [vmem:[%s1 + $0x1c] sm:$0xf]
    %v32 = vld [vmem:[%s1 + $0x20] sm:$0xf]
    %v33 = vld [vmem:[%s1 + $0x24] sm:$0xf]
    %v34 = vld [vmem:[%s1 + $0x28] sm:$0xf]
    %v35 = vld [vmem:[%s1 + $0x2c] sm:$0xf]
    %v36 = vld [vmem:[%s1 + $0x30] sm:$0xf]
    %v37 = vld [vmem:[%s1 + $0x34] sm:$0xf]
    %v38 = vld [vmem:[%s1 + $0x38] sm:$0xf]
    %v39 = vld [vmem:[%s1 + $0x3c] sm:$0xf]
    %v40 = vld [vmem:[%s2] sm:$0x1]
    %v42 = vlaneseq
    %v43 = vshrl.u32 %v42, 7
    %v44 = vsub.s32 0, %v43
    %v45 = vrot.slane %v40, %v44
    %v63 = vunpack.c.l.b16 %v24
    %v64 = vunpack.c.l.b16 %v25
    %v65 = vunpack.c.l.b16 %v26
    %v66 = vunpack.c.l.b16 %v27
    %v67 = vunpack.c.l.b16 %v28
    %v68 = vunpack.c.l.b16 %v29
    %v69 = vunpack.c.l.b16 %v30
    %v70 = vunpack.c.l.b16 %v31
    %v71 = vunpack.c.l.b16 %v32
    %v72 = vunpack.c.l.b16 %v33
    %v73 = vunpack.c.l.b16 %v34
    %v74 = vunpack.c.l.b16 %v35
    %v75 = vunpack.c.l.b16 %v36
    %v76 = vunpack.c.l.b16 %v37
    %v77 = vunpack.c.l.b16 %v38
    %v78 = vunpack.c.l.b16 %v39
    %v79 = vpack.c.b16 %v64, %v63
    %v80 = vpack.c.b16 %v66, %v65
    %v81 = vpack.c.b16 %v68, %v67
    %v82 = vpack.c.b16 %v70, %v69
    %v83 = vpack.c.b16 %v72, %v71
    %v84 = vpack.c.b16 %v74, %v73
    %v85 = vpack.c.b16 %v76, %v75
    %v86 = vpack.c.b16 %v78, %v77
    %95 = vmatprep.subr.bf16.mxu0 0
    %96 = vmatpush1.bf16.msra.mxu0 %v79
    %97 = vmatprep.subr.bf16.mxu0 0
    %98 = vmatpush1.bf16.msra.mxu0 %v80
    %99 = vmatprep.subr.bf16.mxu0 0
    %100 = vmatpush1.bf16.msra.mxu0 %v81
    %101 = vmatprep.subr.bf16.mxu0 0
    %102 = vmatpush1.bf16.msra.mxu0 %v82
    %103 = vmatprep.subr.bf16.mxu0 0
    %104 = vmatpush1.bf16.msra.mxu0 %v83
    %105 = vmatprep.subr.bf16.mxu0 0
    %106 = vmatpush1.bf16.msra.mxu0 %v84
    %107 = vmatprep.subr.bf16.mxu0 0
    %108 = vmatpush1.bf16.msra.mxu0 %v85
    %109 = vmatprep.subr.bf16.mxu0 0
    %110 = vmatpush1.bf16.msra.mxu0 %v86
    %111 = vmatprep.subr.bf16.mxu0 0
    %112 = vmatpush1.bf16.msra.mxu0 0
    %113 = vmatprep.subr.bf16.mxu0 0
    %114 = vmatpush1.bf16.msra.mxu0 0
    %115 = vmatprep.subr.bf16.mxu0 0
    %116 = vmatpush1.bf16.msra.mxu0 0
    %117 = vmatprep.subr.bf16.mxu0 0
    %118 = vmatpush1.bf16.msra.mxu0 0
    %119 = vmatprep.subr.bf16.mxu0 0
    %120 = vmatpush1.bf16.msra.mxu0 0
    %121 = vmatprep.subr.bf16.mxu0 0
    %122 = vmatpush1.bf16.msra.mxu0 0
    %123 = vmatprep.subr.bf16.mxu0 0
    %124 = vmatpush1.bf16.msra.mxu0 0
    %125 = vmatprep.subr.bf16.mxu0 0
    %126 = vmatpush1.bf16.msra.mxu0 0
    %127 = vmatprep.mubr.bf16.mxu0 0
    %128 = vmatmul.mubr.bf16.gmra.mrb[0].mxu0 %v23
    %v129 = vpop.f32.mrb[0].mxu0
    %v130 = vadd.f32 %v45, %v129
    %v131 = vpop.f32.mrb[0].mxu0
    %v132 = vpop.f32.mrb[0].mxu0
    %v133 = vpop.f32.mrb[0].mxu0
    %134 = vdwg.mxu0
    %v135 = vmax.f32 %v130, 0.0
    %v136 = vpack.c.bf16 %v135, %v135
    %v137 = vld [vmem:[%s3] sm:$0xf]
    %v138 = vld [vmem:[%s3 + $0x4] sm:$0xf]
    %v139 = vld [vmem:[%s3 + $0x8] sm:$0xf]
    %v140 = vld [vmem:[%s3 + $0xc] sm:$0xf]
    %v141 = vld [vmem:[%s3 + $0x10] sm:$0xf]
    %v142 = vld [vmem:[%s3 + $0x14] sm:$0xf]
    %v143 = vld [vmem:[%s3 + $0x18] sm:$0xf]
    %v144 = vld [vmem:[%s3 + $0x1c] sm:$0xf]
    %v145 = vld [vmem:[%s3 + $0x20] sm:$0xf]
    %v146 = vld [vmem:[%s3 + $0x24] sm:$0xf]
    %v147 = vld [vmem:[%s3 + $0x28] sm:$0xf]
    %v148 = vld [vmem:[%s3 + $0x2c] sm:$0xf]
    %v149 = vld [vmem:[%s3 + $0x30] sm:$0xf]
    %v150 = vld [vmem:[%s3 + $0x34] sm:$0xf]
    %v151 = vld [vmem:[%s3 + $0x38] sm:$0xf]
    %v152 = vld [vmem:[%s3 + $0x3c] sm:$0xf]
    %v153 = vld [vmem:[%s4] sm:$0x1]
    %v155 = vlaneseq
    %v156 = vshrl.u32 %v155, 7
    %v157 = vsub.s32 0, %v156
    %v158 = vrot.slane %v153, %v157
    %v176 = vunpack.c.l.b16 %v137
    %v177 = vunpack.c.l.b16 %v138
    %v178 = vunpack.c.l.b16 %v139
    %v179 = vunpack.c.l.b16 %v140
    %v180 = vunpack.c.l.b16 %v141
    %v181 = vunpack.c.l.b16 %v142
    %v182 = vunpack.c.l.b16 %v143
    %v183 = vunpack.c.l.b16 %v144
    %v184 = vunpack.c.l.b16 %v145
    %v185 = vunpack.c.l.b16 %v146
    %v186 = vunpack.c.l.b16 %v147
    %v187 = vunpack.c.l.b16 %v148
    %v188 = vunpack.c.l.b16 %v149
    %v189 = vunpack.c.l.b16 %v150
    %v190 = vunpack.c.l.b16 %v151
    %v191 = vunpack.c.l.b16 %v152
    %v192 = vpack.c.b16 %v177, %v176
    %v193 = vpack.c.b16 %v179, %v178
    %v194 = vpack.c.b16 %v181, %v180
    %v195 = vpack.c.b16 %v183, %v182
    %v196 = vpack.c.b16 %v185, %v184
    %v197 = vpack.c.b16 %v187, %v186
    %v198 = vpack.c.b16 %v189, %v188
    %v199 = vpack.c.b16 %v191, %v190
    %208 = vmatprep.subr.bf16.mxu0 0
    %209 = vmatpush1.bf16.msra.mxu0 %v192
    %210 = vmatprep.subr.bf16.mxu0 0
    %211 = vmatpush1.bf16.msra.mxu0 %v193
    %212 = vmatprep.subr.bf16.mxu0 0
    %213 = vmatpush1.bf16.msra.mxu0 %v194
    %214 = vmatprep.subr.bf16.mxu0 0
    %215 = vmatpush1.bf16.msra.mxu0 %v195
    %216 = vmatprep.subr.bf16.mxu0 0
    %217 = vmatpush1.bf16.msra.mxu0 %v196
    %218 = vmatprep.subr.bf16.mxu0 0
    %219 = vmatpush1.bf16.msra.mxu0 %v197
    %220 = vmatprep.subr.bf16.mxu0 0
    %221 = vmatpush1.bf16.msra.mxu0 %v198
    %222 = vmatprep.subr.bf16.mxu0 0
    %223 = vmatpush1.bf16.msra.mxu0 %v199
    %224 = vmatprep.subr.bf16.mxu0 0
    %225 = vmatpush1.bf16.msra.mxu0 0
    %226 = vmatprep.subr.bf16.mxu0 0
    %227 = vmatpush1.bf16.msra.mxu0 0
    %228 = vmatprep.subr.bf16.mxu0 0
    %229 = vmatpush1.bf16.msra.mxu0 0
    %230 = vmatprep.subr.bf16.mxu0 0
    %231 = vmatpush1.bf16.msra.mxu0 0
    %232 = vmatprep.subr.bf16.mxu0 0
    %233 = vmatpush1.bf16.msra.mxu0 0
    %234 = vmatprep.subr.bf16.mxu0 0
    %235 = vmatpush1.bf16.msra.mxu0 0
    %236 = vmatprep.subr.bf16.mxu0 0
    %237 = vmatpush1.bf16.msra.mxu0 0
    %238 = vmatprep.subr.bf16.mxu0 0
    %239 = vmatpush1.bf16.msra.mxu0 0
    %240 = vmatprep.mubr.bf16.mxu0 0
    %241 = vmatmul.mubr.bf16.gmra.mrb[0].mxu0 %v136
    %v242 = vpop.f32.mrb[0].mxu0
    %v243 = vadd.f32 %v158, %v242
    %v244 = vpop.f32.mrb[0].mxu0
    %v245 = vpop.f32.mrb[0].mxu0
    %v246 = vpop.f32.mrb[0].mxu0
    %247 = vdwg.mxu0
    %v248 = vtanh.pop %v243
    %249 = vst [vmem:[#allocation2] sm:$0xff] %v248
    // Predicated region
    $region22: #{decoder_forward.1} parent=1 // pred_check
      _
    $region23: #{decoder_forward.1} parent=1 // pred_check_branch
      %251 = sbr.rel (0) target = $region25
    $region24: #{decoder_forward.1} parent=1 // pred_region
      %s253 = ssub.s32 128, 128
      %254 = vsyncadd [#allocation3], %s253
      %s256 = sshll.u32 [#allocation2], 4
      %s257 = int_to_ptr.vmem [resolvable:$true] %s256
      %259 = dma.vmem_to_hbm [thread:$0]  %s257, 128, %s5, [#allocation3]
    $region25: #{decoder_forward.1} parent=1 // pred_fallthru
      _
    // Predicated region
    $region26: #{decoder_forward.1} parent=1 // pred_check
      _
    $region27: #{decoder_forward.1} parent=1 // pred_check_branch
      %261 = sbr.rel (0) target = $region29
    $region28: #{decoder_forward.1} parent=1 // pred_region
      %262 = dma.done [#allocation3], 128
    $region29: #{decoder_forward.1} parent=1 // pred_fallthru
      _
    %263 = vsyncpa [#allocation3], 1

</llo_original>
